<compile_context>
chip_gen: v7x
topology: tpu7x:2x2x1
jax: 0.10.0
libtpu: 0.0.40
codegen_flags: <defaults>
</compile_context>

<pallas_src>
import jax
import jax.numpy as jnp
from jax import lax
from jax.experimental import pallas as pl
from jax.experimental.pallas import tpu as pltpu


# ----------------------------------------------------------------------------
# Kernel 1: embeddings + hoisted input-gate projections (time-major output)
# ----------------------------------------------------------------------------
def _embed_gates_kernel(we_ref, pos_ref,
                        wpos_ref, bpos_ref, win_ref, bin_ref,
                        wih_f_ref, bih_f_ref, wih_b_ref, bih_b_ref,
                        gf_ref, gb_ref):
    # blocks: we (1, B, W) bf16, pos (1, B, P) bf16 ; outputs (1, B, 3H) f32
    x = (we_ref[0].astype(jnp.float32)
         + jnp.dot(pos_ref[0], wpos_ref[...], preferred_element_type=jnp.float32)
         + bpos_ref[...])                                            # (B, W) f32
    h = (jnp.dot(x.astype(jnp.bfloat16), win_ref[...],
                 preferred_element_type=jnp.float32)
         + bin_ref[...])                                             # (B, H) f32
    hb = h.astype(jnp.bfloat16)
    # fused 3-gate input projections (gate order r|z|n along the 3H lane axis)
    gf_ref[0] = (jnp.dot(hb, wih_f_ref[...], preferred_element_type=jnp.float32)
                 + bih_f_ref[...])
    gb_ref[0] = (jnp.dot(hb, wih_b_ref[...], preferred_element_type=jnp.float32)
                 + bih_b_ref[...])


# ----------------------------------------------------------------------------
# Kernel 2: bidirectional GRU recurrence (masked, pack_padded_sequence
# semantics) + output head.
# ----------------------------------------------------------------------------
def _gru_head_kernel(lens_ref, gf_ref, gb_ref, h0_ref,
                     whh_f_ref, bhh_f_ref, whh_b_ref, bhh_b_ref,
                     w0a_ref, w0b_ref, b0_ref, ln_g_ref, ln_b_ref,
                     w1_ref, b1_ref, out_ref):
    T, Bp, H3 = gf_ref.shape
    H = H3 // 3

    lens = lens_ref[...]                      # (Bp, 1) int32 — replaces (T,B,H) mask
    whh_f = whh_f_ref[...]; bhh_f = bhh_f_ref[...]   # (H, 3H) bf16 resident across T
    whh_b = whh_b_ref[...]; bhh_b = bhh_b_ref[...]

    def step(g_t, h, whh, bhh, m):
        # single fused (B,H)x(H,3H) MXU push per timestep on the serial path
        hg = (jnp.dot(h.astype(jnp.bfloat16), whh,
                      preferred_element_type=jnp.float32) + bhh)     # (Bp, 3H) f32
        r = jax.nn.sigmoid(g_t[:, 0:H] + hg[:, 0:H])
        z = jax.nn.sigmoid(g_t[:, H:2 * H] + hg[:, H:2 * H])
        n = jnp.tanh(g_t[:, 2 * H:] + r * hg[:, 2 * H:])
        h_new = (1.0 - z) * n + z * h
        return m * h_new + (1.0 - m) * h      # m in {0,1}: exact select

    def fwd_body(t, h):
        m = (lens > t).astype(jnp.float32)    # (Bp, 1), broadcast over H
        return step(gf_ref[t], h, whh_f, bhh_f, m)

    def bwd_body(i, h):
        t = T - 1 - i
        m = (lens > t).astype(jnp.float32)
        return step(gb_ref[t], h, whh_b, bhh_b, m)

    unroll = min(T, 8)                        # give LLO cross-timestep visibility
    h_f = lax.fori_loop(0, T, fwd_body, h0_ref[0], unroll=unroll)
    h_b = lax.fori_loop(0, T, bwd_body, h0_ref[1], unroll=unroll)

    # output_net: Linear(2H,H) as split matmuls, LayerNorm(H), LeakyReLU(0.2), Linear(H,O)
    y = (jnp.dot(h_f.astype(jnp.bfloat16), w0a_ref[...],
                 preferred_element_type=jnp.float32)
         + jnp.dot(h_b.astype(jnp.bfloat16), w0b_ref[...],
                   preferred_element_type=jnp.float32)
         + b0_ref[...])
    mu = jnp.mean(y, axis=-1, keepdims=True)
    var = jnp.mean(jnp.square(y - mu), axis=-1, keepdims=True)
    y = (y - mu) * lax.rsqrt(var + 1e-5)
    y = y * ln_g_ref[...] + ln_b_ref[...]
    y = jnp.where(y >= 0.0, y, 0.2 * y)
    out_ref[...] = (jnp.dot(y.astype(jnp.bfloat16), w1_ref[...],
                            preferred_element_type=jnp.float32) + b1_ref[...])


# ----------------------------------------------------------------------------
# Wrapper
# ----------------------------------------------------------------------------
def text_encoder_bigru_co(params, word_embs, pos_onehot, cap_lens):
    B, T, W = word_embs.shape
    P = pos_onehot.shape[-1]
    H = params["hidden_size"]
    O = params["output_size"]
    bf16 = jnp.bfloat16
    f32 = jnp.float32

    # pad batch (sublane axis) to a multiple of 8; padded rows have cap_len 0
    Bp = ((B + 7) // 8) * 8
    pad = Bp - B

    # time-major bf16 inputs (halves HBM traffic; W/P are the small feature dims)
    we_tm = jnp.pad(jnp.transpose(word_embs, (1, 0, 2)),
                    ((0, 0), (0, pad), (0, 0))).astype(bf16)        # (T, Bp, W)
    pos_tm = jnp.pad(jnp.transpose(pos_onehot, (1, 0, 2)),
                     ((0, 0), (0, pad), (0, 0))).astype(bf16)       # (T, Bp, P)
    lens = jnp.pad(cap_lens.astype(jnp.int32), (0, pad)).reshape(Bp, 1)

    full2 = lambda t: (0, 0)

    # ---- kernel 1: embeddings + hoisted, fused input-gate projections ----
    g_f, g_b = pl.pallas_call(
        _embed_gates_kernel,
        out_shape=(jax.ShapeDtypeStruct((T, Bp, 3 * H), f32),
                   jax.ShapeDtypeStruct((T, Bp, 3 * H), f32)),
        grid=(T,),
        in_specs=[
            pl.BlockSpec((1, Bp, W), lambda t: (t, 0, 0)),
            pl.BlockSpec((1, Bp, P), lambda t: (t, 0, 0)),
            pl.BlockSpec((P, W), full2),
            pl.BlockSpec((1, W), full2),
            pl.BlockSpec((W, H), full2),
            pl.BlockSpec((1, H), full2),
            pl.BlockSpec((H, 3 * H), full2),
            pl.BlockSpec((1, 3 * H), full2),
            pl.BlockSpec((H, 3 * H), full2),
            pl.BlockSpec((1, 3 * H), full2),
        ],
        out_specs=(pl.BlockSpec((1, Bp, 3 * H), lambda t: (t, 0, 0)),
                   pl.BlockSpec((1, Bp, 3 * H), lambda t: (t, 0, 0))),
        compiler_params=pltpu.CompilerParams(
            dimension_semantics=("parallel",)),
    )(we_tm, pos_tm,
      params["w_pos"].T.astype(bf16), params["b_pos"][None, :].astype(f32),
      params["w_in"].T.astype(bf16), params["b_in"][None, :].astype(f32),
      params["w_ih_f"].T.astype(bf16), params["b_ih_f"][None, :].astype(f32),
      params["w_ih_b"].T.astype(bf16), params["b_ih_b"][None, :].astype(f32))

    # ---- kernel 2: GRU recurrence + head ----
    h0 = jnp.broadcast_to(params["h0"].astype(f32), (2, Bp, H))
    w0 = params["w_out0"]
    w0a = w0[:, :H].T.astype(bf16)     # multiplies forward final hidden
    w0b = w0[:, H:].T.astype(bf16)     # multiplies backward final hidden

    vmem = pl.BlockSpec(memory_space=pltpu.MemorySpace.VMEM)
    out = pl.pallas_call(
        _gru_head_kernel,
        out_shape=jax.ShapeDtypeStruct((Bp, O), f32),
        in_specs=[vmem] * 15,
        out_specs=vmem,
        compiler_params=pltpu.CompilerParams(vmem_limit_bytes=32 * 1024 * 1024),
    )(lens, g_f, g_b, h0,
      params["w_hh_f"].T.astype(bf16), params["b_hh_f"][None, :].astype(f32),
      params["w_hh_b"].T.astype(bf16), params["b_hh_b"][None, :].astype(f32),
      w0a, w0b, params["b_out0"][None, :].astype(f32),
      params["ln_g"][None, :].astype(f32), params["ln_b"][None, :].astype(f32),
      params["w_out1"].T.astype(bf16), params["b_out1"][None, :].astype(f32))
    return out[:B]


# ----------------------------------------------------------------------------
# Deterministic parameter init (shapes per the PyTorch module __init__)
# ----------------------------------------------------------------------------
def init_params(key, word_size, pos_size, hidden_size, output_size):
    ks = iter(jax.random.split(key, 32))

    def lin(out_dim, in_dim):
        bound = 1.0 / (in_dim ** 0.5)
        w = jax.random.uniform(next(ks), (out_dim, in_dim), jnp.float32, -bound, bound)
        b = jax.random.uniform(next(ks), (out_dim,), jnp.float32, -bound, bound)
        return w, b

    H = hidden_size
    p = {"hidden_size": hidden_size, "output_size": output_size}
    p["w_pos"], p["b_pos"] = lin(word_size, pos_size)        # nn.Linear(pos_size, word_size)
    p["w_in"], p["b_in"] = lin(hidden_size, word_size)       # nn.Linear(word_size, hidden_size)

    gb = 1.0 / (H ** 0.5)
    for d in ("f", "b"):
        p[f"w_ih_{d}"] = jax.random.uniform(next(ks), (3 * H, H), jnp.float32, -gb, gb)
        p[f"w_hh_{d}"] = jax.random.uniform(next(ks), (3 * H, H), jnp.float32, -gb, gb)
        p[f"b_ih_{d}"] = jax.random.uniform(next(ks), (3 * H,), jnp.float32, -gb, gb)
        p[f"b_hh_{d}"] = jax.random.uniform(next(ks), (3 * H,), jnp.float32, -gb, gb)

    p["w_out0"], p["b_out0"] = lin(hidden_size, 2 * hidden_size)  # Linear(2H, H)
    p["ln_g"] = jnp.ones((hidden_size,), jnp.float32)             # LayerNorm(H)
    p["ln_b"] = jnp.zeros((hidden_size,), jnp.float32)
    p["w_out1"], p["b_out1"] = lin(output_size, hidden_size)      # Linear(H, O)
    p["h0"] = jax.random.normal(next(ks), (2, 1, hidden_size), jnp.float32)
    return p


# ----------------------------------------------------------------------------
# Pure-JAX reference of the PyTorch module's math.  Matmul operands are rounded
# to bf16 (f32 accumulation) to mirror the kernel's MXU numerics; all other math
# (gates, blends, LayerNorm) is f32, exactly as in the kernels.
# ----------------------------------------------------------------------------
def reference(params, word_embs, pos_onehot, cap_lens):
    f32, bf = jnp.float32, jnp.bfloat16
    H = params["hidden_size"]

    def mm(a, b):
        return jnp.dot(a.astype(bf), b.astype(bf), preferred_element_type=f32)

    x = (word_embs.astype(bf).astype(f32)
         + mm(pos_onehot, params["w_pos"].T) + params["b_pos"])
    x = mm(x, params["w_in"].T) + params["b_in"]                 # (B, T, H)
    B, T, _ = x.shape

    g_f = mm(x, params["w_ih_f"].T) + params["b_ih_f"]           # (B, T, 3H)
    g_b = mm(x, params["w_ih_b"].T) + params["b_ih_b"]
    mask = (jnp.arange(T)[None, :] < cap_lens[:, None]).astype(f32)

    def cell(g, h, w_hh, b_hh):
        hg = mm(h, w_hh.T) + b_hh
        i_r, i_z, i_n = jnp.split(g, 3, axis=-1)
        h_r, h_z, h_n = jnp.split(hg, 3, axis=-1)
        r = jax.nn.sigmoid(i_r + h_r)
        z = jax.nn.sigmoid(i_z + h_z)
        n = jnp.tanh(i_n + r * h_n)
        return (1.0 - z) * n + z * h

    h_f = jnp.broadcast_to(params["h0"][0], (B, H)).astype(f32)
    for t in range(T):
        hn = cell(g_f[:, t], h_f, params["w_hh_f"], params["b_hh_f"])
        m = mask[:, t:t + 1]
        h_f = m * hn + (1.0 - m) * h_f
    h_b = jnp.broadcast_to(params["h0"][1], (B, H)).astype(f32)
    for t in range(T - 1, -1, -1):
        hn = cell(g_b[:, t], h_b, params["w_hh_b"], params["b_hh_b"])
        m = mask[:, t:t + 1]
        h_b = m * hn + (1.0 - m) * h_b

    h_cat = jnp.concatenate([h_f, h_b], axis=-1)
    y = mm(h_cat, params["w_out0"].T) + params["b_out0"]
    mu = y.mean(-1, keepdims=True)
    var = jnp.square(y - mu).mean(-1, keepdims=True)
    y = (y - mu) * lax.rsqrt(var + 1e-5)
    y = y * params["ln_g"] + params["ln_b"]
    y = jnp.where(y >= 0.0, y, 0.2 * y)
    return mm(y, params["w_out1"].T) + params["b_out1"]


if __name__ == "__main__":
    B, T = 2, 8
    word_size, pos_size, hidden_size, output_size = 32, 16, 32, 64

    key = jax.random.PRNGKey(0)
    kp, kw, ki = jax.random.split(key, 3)
    params = init_params(kp, word_size, pos_size, hidden_size, output_size)

    word_embs = jax.random.normal(kw, (B, T, word_size), jnp.float32)
    pos_ids = jax.random.randint(ki, (B, T), 0, pos_size)
    pos_onehot = jax.nn.one_hot(pos_ids, pos_size, dtype=jnp.float32)
    cap_lens = jnp.array([8, 5], dtype=jnp.int32)   # sorted descending (pack_padded_sequence)

    out = text_encoder_bigru_co(params, word_embs, pos_onehot, cap_lens)
    out = jax.block_until_ready(out)

    ref = reference(params, word_embs, pos_onehot, cap_lens)
    assert out.shape == (B, output_size)
    err = jnp.max(jnp.abs(out - ref))
    assert jnp.allclose(out, ref, atol=5e-3, rtol=5e-3), f"max abs err {err}"
    print("KERNEL_OK")
</pallas_src>

<mosaic_0001>
module attributes {stable_mosaic.version = 11 : i64} {
  func.func @_embed_gates_kernel(%arg0: i32, %arg1: memref<1x8x32xbf16, #tpu.memory_space<vmem>>, %arg2: memref<1x8x16xbf16, #tpu.memory_space<vmem>>, %arg3: memref<16x32xbf16, #tpu.memory_space<vmem>>, %arg4: memref<1x32xf32, #tpu.memory_space<vmem>>, %arg5: memref<32x32xbf16, #tpu.memory_space<vmem>>, %arg6: memref<1x32xf32, #tpu.memory_space<vmem>>, %arg7: memref<32x96xbf16, #tpu.memory_space<vmem>>, %arg8: memref<1x96xf32, #tpu.memory_space<vmem>>, %arg9: memref<32x96xbf16, #tpu.memory_space<vmem>>, %arg10: memref<1x96xf32, #tpu.memory_space<vmem>>, %arg11: memref<1x8x96xf32, #tpu.memory_space<vmem>>, %arg12: memref<1x8x96xf32, #tpu.memory_space<vmem>>) attributes {dimension_semantics = [#tpu.dimension_semantics<parallel>], iteration_bounds = array<i64: 8>, scalar_prefetch = 0 : i64, scratch_operands = 0 : i64, tpu.core_type = #tpu.core_type<tc>, window_params = [{transform_indices = @transform_0, window_bounds = array<i64: 1, 8, 32>}, {transform_indices = @transform_1, window_bounds = array<i64: 1, 8, 16>}, {pipeline_mode = #tpu.pipeline_mode<synchronous>, transform_indices = @transform_2, window_bounds = array<i64: 16, 32>}, {pipeline_mode = #tpu.pipeline_mode<synchronous>, transform_indices = @transform_3, window_bounds = array<i64: 1, 32>}, {pipeline_mode = #tpu.pipeline_mode<synchronous>, transform_indices = @transform_4, window_bounds = array<i64: 32, 32>}, {pipeline_mode = #tpu.pipeline_mode<synchronous>, transform_indices = @transform_5, window_bounds = array<i64: 1, 32>}, {pipeline_mode = #tpu.pipeline_mode<synchronous>, transform_indices = @transform_6, window_bounds = array<i64: 32, 96>}, {pipeline_mode = #tpu.pipeline_mode<synchronous>, transform_indices = @transform_7, window_bounds = array<i64: 1, 96>}, {pipeline_mode = #tpu.pipeline_mode<synchronous>, transform_indices = @transform_8, window_bounds = array<i64: 32, 96>}, {pipeline_mode = #tpu.pipeline_mode<synchronous>, transform_indices = @transform_9, window_bounds = array<i64: 1, 96>}, {transform_indices = @transform_10, window_bounds = array<i64: 1, 8, 96>}, {transform_indices = @transform_11, window_bounds = array<i64: 1, 8, 96>}]} {
    %c0 = arith.constant 0 : index
    %c0_0 = arith.constant 0 : index
    %c0_1 = arith.constant 0 : index
    %0 = vector.load %arg1[%c0, %c0_0, %c0_1] : memref<1x8x32xbf16, #tpu.memory_space<vmem>>, vector<1x8x32xbf16>
    %1 = vector.shape_cast %0 : vector<1x8x32xbf16> to vector<8x32xbf16>
    %2 = arith.extf %1 : vector<8x32xbf16> to vector<8x32xf32>
    %c0_2 = arith.constant 0 : index
    %c0_3 = arith.constant 0 : index
    %c0_4 = arith.constant 0 : index
    %3 = vector.load %arg2[%c0_2, %c0_3, %c0_4] : memref<1x8x16xbf16, #tpu.memory_space<vmem>>, vector<1x8x16xbf16>
    %4 = vector.shape_cast %3 : vector<1x8x16xbf16> to vector<8x16xbf16>
    %c0_5 = arith.constant 0 : index
    %c0_6 = arith.constant 0 : index
    %5 = vector.load %arg3[%c0_5, %c0_6] : memref<16x32xbf16, #tpu.memory_space<vmem>>, vector<16x32xbf16>
    %cst = arith.constant dense<0.000000e+00> : vector<8x32xf32>
    %6 = tpu.matmul %4, %5, %cst {dimension_numbers = #tpu.dot_dimension_numbers<[1], [0], [0], [1], [0, 0, 1, 1], [], []>} : vector<8x16xbf16>, vector<16x32xbf16>, vector<8x32xf32> -> vector<8x32xf32>
    %7 = arith.addf %2, %6 : vector<8x32xf32>
    %c0_7 = arith.constant 0 : index
    %c0_8 = arith.constant 0 : index
    %8 = vector.load %arg4[%c0_7, %c0_8] : memref<1x32xf32, #tpu.memory_space<vmem>>, vector<1x32xf32>
    %9 = vector.broadcast %8 : vector<1x32xf32> to vector<8x32xf32>
    %10 = arith.addf %7, %9 : vector<8x32xf32>
    %11 = arith.truncf %10 : vector<8x32xf32> to vector<8x32xbf16>
    %c0_9 = arith.constant 0 : index
    %c0_10 = arith.constant 0 : index
    %12 = vector.load %arg5[%c0_9, %c0_10] : memref<32x32xbf16, #tpu.memory_space<vmem>>, vector<32x32xbf16>
    %cst_11 = arith.constant dense<0.000000e+00> : vector<8x32xf32>
    %13 = tpu.matmul %11, %12, %cst_11 {dimension_numbers = #tpu.dot_dimension_numbers<[1], [0], [0], [1], [0, 0, 1, 1], [], []>} : vector<8x32xbf16>, vector<32x32xbf16>, vector<8x32xf32> -> vector<8x32xf32>
    %c0_12 = arith.constant 0 : index
    %c0_13 = arith.constant 0 : index
    %14 = vector.load %arg6[%c0_12, %c0_13] : memref<1x32xf32, #tpu.memory_space<vmem>>, vector<1x32xf32>
    %15 = vector.broadcast %14 : vector<1x32xf32> to vector<8x32xf32>
    %16 = arith.addf %13, %15 : vector<8x32xf32>
    %17 = arith.truncf %16 : vector<8x32xf32> to vector<8x32xbf16>
    %c0_14 = arith.constant 0 : index
    %c0_15 = arith.constant 0 : index
    %18 = vector.load %arg7[%c0_14, %c0_15] : memref<32x96xbf16, #tpu.memory_space<vmem>>, vector<32x96xbf16>
    %cst_16 = arith.constant dense<0.000000e+00> : vector<8x96xf32>
    %19 = tpu.matmul %17, %18, %cst_16 {dimension_numbers = #tpu.dot_dimension_numbers<[1], [0], [0], [1], [0, 0, 1, 1], [], []>} : vector<8x32xbf16>, vector<32x96xbf16>, vector<8x96xf32> -> vector<8x96xf32>
    %c0_17 = arith.constant 0 : index
    %c0_18 = arith.constant 0 : index
    %20 = vector.load %arg8[%c0_17, %c0_18] : memref<1x96xf32, #tpu.memory_space<vmem>>, vector<1x96xf32>
    %21 = vector.broadcast %20 : vector<1x96xf32> to vector<8x96xf32>
    %22 = arith.addf %19, %21 : vector<8x96xf32>
    %c0_19 = arith.constant 0 : index
    %c0_20 = arith.constant 0 : index
    %c0_21 = arith.constant 0 : index
    %23 = vector.load %arg11[%c0_19, %c0_20, %c0_21] : memref<1x8x96xf32, #tpu.memory_space<vmem>>, vector<1x8x96xf32>
    %24 = vector.shape_cast %23 : vector<1x8x96xf32> to vector<8x96xf32>
    %25 = vector.shape_cast %22 : vector<8x96xf32> to vector<1x8x96xf32>
    tpu.vector_store %arg11[%c0_19, %c0_20, %c0_21], %25 {strides = array<i32>} : memref<1x8x96xf32, #tpu.memory_space<vmem>>, vector<1x8x96xf32>,
    %c0_22 = arith.constant 0 : index
    %c0_23 = arith.constant 0 : index
    %26 = vector.load %arg9[%c0_22, %c0_23] : memref<32x96xbf16, #tpu.memory_space<vmem>>, vector<32x96xbf16>
    %cst_24 = arith.constant dense<0.000000e+00> : vector<8x96xf32>
    %27 = tpu.matmul %17, %26, %cst_24 {dimension_numbers = #tpu.dot_dimension_numbers<[1], [0], [0], [1], [0, 0, 1, 1], [], []>} : vector<8x32xbf16>, vector<32x96xbf16>, vector<8x96xf32> -> vector<8x96xf32>
    %c0_25 = arith.constant 0 : index
    %c0_26 = arith.constant 0 : index
    %28 = vector.load %arg10[%c0_25, %c0_26] : memref<1x96xf32, #tpu.memory_space<vmem>>, vector<1x96xf32>
    %29 = vector.broadcast %28 : vector<1x96xf32> to vector<8x96xf32>
    %30 = arith.addf %27, %29 : vector<8x96xf32>
    %c0_27 = arith.constant 0 : index
    %c0_28 = arith.constant 0 : index
    %c0_29 = arith.constant 0 : index
    %31 = vector.load %arg12[%c0_27, %c0_28, %c0_29] : memref<1x8x96xf32, #tpu.memory_space<vmem>>, vector<1x8x96xf32>
    %32 = vector.shape_cast %31 : vector<1x8x96xf32> to vector<8x96xf32>
    %33 = vector.shape_cast %30 : vector<8x96xf32> to vector<1x8x96xf32>
    tpu.vector_store %arg12[%c0_27, %c0_28, %c0_29], %33 {strides = array<i32>} : memref<1x8x96xf32, #tpu.memory_space<vmem>>, vector<1x8x96xf32>,
    return
  }
  func.func @transform_0(%arg0: i32) -> (i32, i32, i32) {
    %c0_i32 = arith.constant 0 : i32
    %c0_i32_0 = arith.constant 0 : i32
    %c0_i32_1 = arith.constant 0 : i32
    return %arg0, %c0_i32, %c0_i32_0 : i32, i32, i32
  }
  func.func @transform_1(%arg0: i32) -> (i32, i32, i32) {
    %c0_i32 = arith.constant 0 : i32
    %c0_i32_0 = arith.constant 0 : i32
    %c0_i32_1 = arith.constant 0 : i32
    return %arg0, %c0_i32, %c0_i32_0 : i32, i32, i32
  }
  func.func @transform_2(%arg0: i32) -> (i32, i32) {
    %c0_i32 = arith.constant 0 : i32
    %c0_i32_0 = arith.constant 0 : i32
    %c0_i32_1 = arith.constant 0 : i32
    return %c0_i32, %c0_i32_0 : i32, i32
  }
  func.func @transform_3(%arg0: i32) -> (i32, i32) {
    %c0_i32 = arith.constant 0 : i32
    %c0_i32_0 = arith.constant 0 : i32
    %c0_i32_1 = arith.constant 0 : i32
    return %c0_i32, %c0_i32_0 : i32, i32
  }
  func.func @transform_4(%arg0: i32) -> (i32, i32) {
    %c0_i32 = arith.constant 0 : i32
    %c0_i32_0 = arith.constant 0 : i32
    %c0_i32_1 = arith.constant 0 : i32
    return %c0_i32, %c0_i32_0 : i32, i32
  }
  func.func @transform_5(%arg0: i32) -> (i32, i32) {
    %c0_i32 = arith.constant 0 : i32
    %c0_i32_0 = arith.constant 0 : i32
    %c0_i32_1 = arith.constant 0 : i32
    return %c0_i32, %c0_i32_0 : i32, i32
  }
  func.func @transform_6(%arg0: i32) -> (i32, i32) {
    %c0_i32 = arith.constant 0 : i32
    %c0_i32_0 = arith.constant 0 : i32
    %c0_i32_1 = arith.constant 0 : i32
    return %c0_i32, %c0_i32_0 : i32, i32
  }
  func.func @transform_7(%arg0: i32) -> (i32, i32) {
    %c0_i32 = arith.constant 0 : i32
    %c0_i32_0 = arith.constant 0 : i32
    %c0_i32_1 = arith.constant 0 : i32
    return %c0_i32, %c0_i32_0 : i32, i32
  }
  func.func @transform_8(%arg0: i32) -> (i32, i32) {
    %c0_i32 = arith.constant 0 : i32
    %c0_i32_0 = arith.constant 0 : i32
    %c0_i32_1 = arith.constant 0 : i32
    return %c0_i32, %c0_i32_0 : i32, i32
  }
  func.func @transform_9(%arg0: i32) -> (i32, i32) {
    %c0_i32 = arith.constant 0 : i32
    %c0_i32_0 = arith.constant 0 : i32
    %c0_i32_1 = arith.constant 0 : i32
    return %c0_i32, %c0_i32_0 : i32, i32
  }
  func.func @transform_10(%arg0: i32) -> (i32, i32, i32) {
    %c0_i32 = arith.constant 0 : i32
    %c0_i32_0 = arith.constant 0 : i32
    %c0_i32_1 = arith.constant 0 : i32
    return %arg0, %c0_i32, %c0_i32_0 : i32, i32, i32
  }
  func.func @transform_11(%arg0: i32) -> (i32, i32, i32) {
    %c0_i32 = arith.constant 0 : i32
    %c0_i32_0 = arith.constant 0 : i32
    %c0_i32_1 = arith.constant 0 : i32
    return %arg0, %c0_i32, %c0_i32_0 : i32, i32, i32
  }
}

</mosaic_0001>

<llo_original>
// kernel: tpu_custom_call.1
$region0: #{tpu_custom_call.1}
  #allocation0 [shape = 'u32[]', space=smem, size = 0x4, offset = 0x4, fixed_abs, tag = 'smem constant byte address 0x4 - core index']
  #allocation1 [shape = 'u32[144,128]{1,0:T(1,128)}', space=vmem, size = 0x12000, scoped, tag = 'internal scratch']
  %s0 = inlined_call_operand.hbm [shape: bf16[8,8,32], index: 0, kind: input, shape index: {}]
  %s1 = inlined_call_operand.hbm [shape: bf16[8,8,16], index: 1, kind: input, shape index: {}]
  %s2 = inlined_call_operand.hbm [shape: bf16[16,32], index: 2, kind: input, shape index: {}]
  %s3 = inlined_call_operand.vmem [shape: f32[1,32], index: 3, kind: input, shape index: {}]
  %s4 = inlined_call_operand.hbm [shape: bf16[32,32], index: 4, kind: input, shape index: {}]
  %s5 = inlined_call_operand.vmem [shape: f32[1,32], index: 5, kind: input, shape index: {}]
  %s6 = inlined_call_operand.vmem [shape: bf16[32,96], index: 6, kind: input, shape index: {}]
  %s7 = inlined_call_operand.vmem [shape: f32[1,96], index: 7, kind: input, shape index: {}]
  %s8 = inlined_call_operand.hbm [shape: bf16[32,96], index: 8, kind: input, shape index: {}]
  %s9 = inlined_call_operand.vmem [shape: f32[1,96], index: 9, kind: input, shape index: {}]
  %s10 = inlined_call_operand.hbm [shape: f32[8,8,96], index: 10, kind: output, shape index: {0}]
  %s11 = inlined_call_operand.hbm [shape: f32[8,8,96], index: 11, kind: output, shape index: {1}]
  %12 = xla_tuple %s10, %s11
  %s13 = sld [smem:[#allocation0]]
  $region101: #{tpu_custom_call.1} parent=0
    _
  %s15 = ssub.s32 1, %s13
  %s16 = scalar_select 0, %s15, %s13
  $region1: #{tpu_custom_call.1} parent=0
    #allocation2 [shape = 'u8[4096]{0}', space=vmem, size = 0x1000, scoped, tag = 'input window, operand 0']
    #allocation3 [shape = 's32[2]{0}', space=sflag, size = 0x8, scoped, tag = 'scoped memory for tpu_custom_call.1']
    #allocation4 [shape = 's32[2]{0}', space=sflag, size = 0x8, scoped, tag = 'scoped memory for tpu_custom_call.1']
    #allocation5 [shape = 'u8[4096]{0}', space=vmem, size = 0x1000, scoped, tag = 'input window, operand 1']
    #allocation6 [shape = 's32[2]{0}', space=sflag, size = 0x8, scoped, tag = 'scoped memory for tpu_custom_call.1']
    #allocation7 [shape = 'u8[4096]{0}', space=vmem, size = 0x1000, scoped, tag = 'input window, operand 2, single buffered']
    #allocation8 [shape = 'u8[8192]{0}', space=vmem, size = 0x2000, scoped, tag = 'input window, operand 4, single buffered']
    #allocation9 [shape = 's32[1]{0}', space=sflag, size = 0x4, scoped, tag = 'scoped memory for tpu_custom_call.1']
    #allocation10 [shape = 'u8[8192]{0}', space=vmem, size = 0x2000, scoped, tag = 'input window, operand 8, single buffered']
    #allocation11 [shape = 'u8[8192]{0}', space=vmem, size = 0x2000, scoped, tag = 'output window, operand 0']
    #allocation12 [shape = 'u8[8192]{0}', space=vmem, size = 0x2000, scoped, tag = 'output window, operand 1']
    #allocation13 [shape = 's32[2]{0}', space=sflag, size = 0x8, scoped, tag = 'scoped memory for tpu_custom_call.1']
    %17 = vsyncpa [#allocation3], 0
    %s18 = scalar_lea.sflag [#allocation3], 1
    %19 = vsyncpa %s18, 0
    %20 = vsyncpa [#allocation6], 0
    %s21 = scalar_lea.sflag [#allocation6], 1
    %22 = vsyncpa %s21, 0
    %23 = vsyncpa [#allocation9], 0
    %24 = vsyncpa [#allocation4], 0
    %s25 = scalar_lea.sflag [#allocation4], 1
    %26 = vsyncpa %s25, 0
    %27 = vsyncpa [#allocation13], 0
    %s28 = scalar_lea.sflag [#allocation13], 1
    %29 = vsyncpa %s28, 0
    loop: start=0, step=1, limit=10
    $region2: #{tpu_custom_call.1} parent=1 // loop_pre_header
      _
    $region3: #{tpu_custom_call.1} parent=1 // loop_header
      %s31 = sphi 0, %s35
      %p32 = scmp.ge.s32.totalorder %s31, 10
      %s41 = sphi 0, %s43
      %s44 = sphi 0, %s41
      %s45 = sphi 0, %s44
      %s61 = sphi 0, %s45
      %s67 = sphi 0, %s69
      %s70 = sphi 0, %s67
      %s71 = sphi 0, %s70
      %s87 = sphi 0, %s71
      %s91 = sphi 0, %s91
      %s93 = sphi 0, %s91
      %s94 = sphi 0, %s93
      %s108 = sphi 0, %s94
      %s112 = sphi 0, %s112
      %s114 = sphi 0, %s112
      %s115 = sphi 0, %s114
      %s129 = sphi 0, %s115
      %s133 = sphi 0, %s133
      %s135 = sphi 0, %s133
      %s136 = sphi 0, %s135
      %s150 = sphi 0, %s136
      %s154 = sphi 0, %s154
      %s156 = sphi 0, %s154
      %s157 = sphi 0, %s156
      %s171 = sphi 0, %s157
      %s175 = sphi 0, %s175
      %s177 = sphi 0, %s175
      %s178 = sphi 0, %s177
      %s192 = sphi 0, %s178
      %s196 = sphi 0, %s196
      %s198 = sphi 0, %s196
      %s199 = sphi 0, %s198
      %s213 = sphi 0, %s199
      %s217 = sphi 0, %s217
      %s219 = sphi 0, %s217
      %s220 = sphi 0, %s219
      %s234 = sphi 0, %s220
      %s238 = sphi 0, %s238
      %s240 = sphi 0, %s238
      %s241 = sphi 0, %s240
      %s255 = sphi 0, %s241
      %s261 = sphi 0, %s263
      %s264 = sphi 0, %s261
      %s265 = sphi 0, %s264
      %s281 = sphi 0, %s265
      %s287 = sphi 0, %s289
      %s290 = sphi 0, %s287
      %s291 = sphi 0, %s290
      %s307 = sphi 0, %s291
    $region4: #{tpu_custom_call.1} parent=1 // loop_header_branch
      %34 = sbr.rel (%p32) target = $region8
    $region5: #{tpu_custom_call.1} parent=1 // loop_body
      %s36 = ssub.s32 %s31, 1
      %s37 = ssub.s32 %s31, 2
      %s38 = sadd.s32 %s31, 1
      %s39 = ssub.s32 %s31, %s38
      %p40 = scmp.eq.s32.totalorder %s39, 0
      %s42 = sadd.s32 %s41, 1
      %s43 = scalar_select %p40, %s41, %s42
      %p46 = pneg %p40
      %p47 = scmp.eq.s32.totalorder %s31, 7
      %p48 = por %p46, %p47
      %p49 = scmp.ne.s32.totalorder %s41, %s44
      %p50 = scmp.eq.s32.totalorder %s31, 0
      %p51 = por %p49, %p50
      %p52 = scmp.ne.s32.totalorder %s41, %s44
      %p53 = scmp.eq.s32.totalorder %s36, 7
      %p54 = por %p52, %p53
      %p55 = scmp.ne.s32.totalorder %s44, %s45
      %p56 = scmp.eq.s32.totalorder %s36, 0
      %p57 = por %p55, %p56
      %p58 = scmp.ne.s32.totalorder %s44, %s45
      %p59 = scmp.eq.s32.totalorder %s37, 7
      %p60 = por %p58, %p59
      %p62 = scmp.ne.s32.totalorder %s45, %s61
      %p63 = scmp.eq.s32.totalorder %s37, 0
      %p64 = por %p62, %p63
      %s65 = ssub.s32 %s31, %s38
      %p66 = scmp.eq.s32.totalorder %s65, 0
      %s68 = sadd.s32 %s67, 1
      %s69 = scalar_select %p66, %s67, %s68
      %p72 = pneg %p66
      %p73 = scmp.eq.s32.totalorder %s31, 7
      %p74 = por %p72, %p73
      %p75 = scmp.ne.s32.totalorder %s67, %s70
      %p76 = scmp.eq.s32.totalorder %s31, 0
      %p77 = por %p75, %p76
      %p78 = scmp.ne.s32.totalorder %s67, %s70
      %p79 = scmp.eq.s32.totalorder %s36, 7
      %p80 = por %p78, %p79
      %p81 = scmp.ne.s32.totalorder %s70, %s71
      %p82 = scmp.eq.s32.totalorder %s36, 0
      %p83 = por %p81, %p82
      %p84 = scmp.ne.s32.totalorder %s70, %s71
      %p85 = scmp.eq.s32.totalorder %s37, 7
      %p86 = por %p84, %p85
      %p88 = scmp.ne.s32.totalorder %s71, %s87
      %p89 = scmp.eq.s32.totalorder %s37, 0
      %p90 = por %p88, %p89
      %s92 = sadd.s32 %s91, 1
      %p95 = scmp.eq.s32.totalorder %s31, 7
      %p96 = scmp.ne.s32.totalorder %s91, %s93
      %p97 = scmp.eq.s32.totalorder %s31, 0
      %p98 = por %p96, %p97
      %p99 = scmp.ne.s32.totalorder %s91, %s93
      %p100 = scmp.eq.s32.totalorder %s36, 7
      %p101 = por %p99, %p100
      %p102 = scmp.ne.s32.totalorder %s93, %s94
      %p103 = scmp.eq.s32.totalorder %s36, 0
      %p104 = por %p102, %p103
      %p105 = scmp.ne.s32.totalorder %s93, %s94
      %p106 = scmp.eq.s32.totalorder %s37, 7
      %p107 = por %p105, %p106
      %p109 = scmp.ne.s32.totalorder %s94, %s108
      %p110 = scmp.eq.s32.totalorder %s37, 0
      %p111 = por %p109, %p110
      %s113 = sadd.s32 %s112, 1
      %p116 = scmp.eq.s32.totalorder %s31, 7
      %p117 = scmp.ne.s32.totalorder %s112, %s114
      %p118 = scmp.eq.s32.totalorder %s31, 0
      %p119 = por %p117, %p118
      %p120 = scmp.ne.s32.totalorder %s112, %s114
      %p121 = scmp.eq.s32.totalorder %s36, 7
      %p122 = por %p120, %p121
      %p123 = scmp.ne.s32.totalorder %s114, %s115
      %p124 = scmp.eq.s32.totalorder %s36, 0
      %p125 = por %p123, %p124
      %p126 = scmp.ne.s32.totalorder %s114, %s115
      %p127 = scmp.eq.s32.totalorder %s37, 7
      %p128 = por %p126, %p127
      %p130 = scmp.ne.s32.totalorder %s115, %s129
      %p131 = scmp.eq.s32.totalorder %s37, 0
      %p132 = por %p130, %p131
      %s134 = sadd.s32 %s133, 1
      %p137 = scmp.eq.s32.totalorder %s31, 7
      %p138 = scmp.ne.s32.totalorder %s133, %s135
      %p139 = scmp.eq.s32.totalorder %s31, 0
      %p140 = por %p138, %p139
      %p141 = scmp.ne.s32.totalorder %s133, %s135
      %p142 = scmp.eq.s32.totalorder %s36, 7
      %p143 = por %p141, %p142
      %p144 = scmp.ne.s32.totalorder %s135, %s136
      %p145 = scmp.eq.s32.totalorder %s36, 0
      %p146 = por %p144, %p145
      %p147 = scmp.ne.s32.totalorder %s135, %s136
      %p148 = scmp.eq.s32.totalorder %s37, 7
      %p149 = por %p147, %p148
      %p151 = scmp.ne.s32.totalorder %s136, %s150
      %p152 = scmp.eq.s32.totalorder %s37, 0
      %p153 = por %p151, %p152
      %s155 = sadd.s32 %s154, 1
      %p158 = scmp.eq.s32.totalorder %s31, 7
      %p159 = scmp.ne.s32.totalorder %s154, %s156
      %p160 = scmp.eq.s32.totalorder %s31, 0
      %p161 = por %p159, %p160
      %p162 = scmp.ne.s32.totalorder %s154, %s156
      %p163 = scmp.eq.s32.totalorder %s36, 7
      %p164 = por %p162, %p163
      %p165 = scmp.ne.s32.totalorder %s156, %s157
      %p166 = scmp.eq.s32.totalorder %s36, 0
      %p167 = por %p165, %p166
      %p168 = scmp.ne.s32.totalorder %s156, %s157
      %p169 = scmp.eq.s32.totalorder %s37, 7
      %p170 = por %p168, %p169
      %p172 = scmp.ne.s32.totalorder %s157, %s171
      %p173 = scmp.eq.s32.totalorder %s37, 0
      %p174 = por %p172, %p173
      %s176 = sadd.s32 %s175, 1
      %p179 = scmp.eq.s32.totalorder %s31, 7
      %p180 = scmp.ne.s32.totalorder %s175, %s177
      %p181 = scmp.eq.s32.totalorder %s31, 0
      %p182 = por %p180, %p181
      %p183 = scmp.ne.s32.totalorder %s175, %s177
      %p184 = scmp.eq.s32.totalorder %s36, 7
      %p185 = por %p183, %p184
      %p186 = scmp.ne.s32.totalorder %s177, %s178
      %p187 = scmp.eq.s32.totalorder %s36, 0
      %p188 = por %p186, %p187
      %p189 = scmp.ne.s32.totalorder %s177, %s178
      %p190 = scmp.eq.s32.totalorder %s37, 7
      %p191 = por %p189, %p190
      %p193 = scmp.ne.s32.totalorder %s178, %s192
      %p194 = scmp.eq.s32.totalorder %s37, 0
      %p195 = por %p193, %p194
      %s197 = sadd.s32 %s196, 1
      %p200 = scmp.eq.s32.totalorder %s31, 7
      %p201 = scmp.ne.s32.totalorder %s196, %s198
      %p202 = scmp.eq.s32.totalorder %s31, 0
      %p203 = por %p201, %p202
      %p204 = scmp.ne.s32.totalorder %s196, %s198
      %p205 = scmp.eq.s32.totalorder %s36, 7
      %p206 = por %p204, %p205
      %p207 = scmp.ne.s32.totalorder %s198, %s199
      %p208 = scmp.eq.s32.totalorder %s36, 0
      %p209 = por %p207, %p208
      %p210 = scmp.ne.s32.totalorder %s198, %s199
      %p211 = scmp.eq.s32.totalorder %s37, 7
      %p212 = por %p210, %p211
      %p214 = scmp.ne.s32.totalorder %s199, %s213
      %p215 = scmp.eq.s32.totalorder %s37, 0
      %p216 = por %p214, %p215
      %s218 = sadd.s32 %s217, 1
      %p221 = scmp.eq.s32.totalorder %s31, 7
      %p222 = scmp.ne.s32.totalorder %s217, %s219
      %p223 = scmp.eq.s32.totalorder %s31, 0
      %p224 = por %p222, %p223
      %p225 = scmp.ne.s32.totalorder %s217, %s219
      %p226 = scmp.eq.s32.totalorder %s36, 7
      %p227 = por %p225, %p226
      %p228 = scmp.ne.s32.totalorder %s219, %s220
      %p229 = scmp.eq.s32.totalorder %s36, 0
      %p230 = por %p228, %p229
      %p231 = scmp.ne.s32.totalorder %s219, %s220
      %p232 = scmp.eq.s32.totalorder %s37, 7
      %p233 = por %p231, %p232
      %p235 = scmp.ne.s32.totalorder %s220, %s234
      %p236 = scmp.eq.s32.totalorder %s37, 0
      %p237 = por %p235, %p236
      %s239 = sadd.s32 %s238, 1
      %p242 = scmp.eq.s32.totalorder %s31, 7
      %p243 = scmp.ne.s32.totalorder %s238, %s240
      %p244 = scmp.eq.s32.totalorder %s31, 0
      %p245 = por %p243, %p244
      %p246 = scmp.ne.s32.totalorder %s238, %s240
      %p247 = scmp.eq.s32.totalorder %s36, 7
      %p248 = por %p246, %p247
      %p249 = scmp.ne.s32.totalorder %s240, %s241
      %p250 = scmp.eq.s32.totalorder %s36, 0
      %p251 = por %p249, %p250
      %p252 = scmp.ne.s32.totalorder %s240, %s241
      %p253 = scmp.eq.s32.totalorder %s37, 7
      %p254 = por %p252, %p253
      %p256 = scmp.ne.s32.totalorder %s241, %s255
      %p257 = scmp.eq.s32.totalorder %s37, 0
      %p258 = por %p256, %p257
      %s259 = ssub.s32 %s31, %s38
      %p260 = scmp.eq.s32.totalorder %s259, 0
      %s262 = sadd.s32 %s261, 1
      %s263 = scalar_select %p260, %s261, %s262
      %p266 = pneg %p260
      %p267 = scmp.eq.s32.totalorder %s31, 7
      %p268 = por %p266, %p267
      %p269 = scmp.ne.s32.totalorder %s261, %s264
      %p270 = scmp.eq.s32.totalorder %s31, 0
      %p271 = por %p269, %p270
      %p272 = scmp.ne.s32.totalorder %s261, %s264
      %p273 = scmp.eq.s32.totalorder %s36, 7
      %p274 = por %p272, %p273
      %p275 = scmp.ne.s32.totalorder %s264, %s265
      %p276 = scmp.eq.s32.totalorder %s36, 0
      %p277 = por %p275, %p276
      %p278 = scmp.ne.s32.totalorder %s264, %s265
      %p279 = scmp.eq.s32.totalorder %s37, 7
      %p280 = por %p278, %p279
      %p282 = scmp.ne.s32.totalorder %s265, %s281
      %p283 = scmp.eq.s32.totalorder %s37, 0
      %p284 = por %p282, %p283
      %s285 = ssub.s32 %s31, %s38
      %p286 = scmp.eq.s32.totalorder %s285, 0
      %s288 = sadd.s32 %s287, 1
      %s289 = scalar_select %p286, %s287, %s288
      %p292 = pneg %p286
      %p293 = scmp.eq.s32.totalorder %s31, 7
      %p294 = por %p292, %p293
      %p295 = scmp.ne.s32.totalorder %s287, %s290
      %p296 = scmp.eq.s32.totalorder %s31, 0
      %p297 = por %p295, %p296
      %p298 = scmp.ne.s32.totalorder %s287, %s290
      %p299 = scmp.eq.s32.totalorder %s36, 7
      %p300 = por %p298, %p299
      %p301 = scmp.ne.s32.totalorder %s290, %s291
      %p302 = scmp.eq.s32.totalorder %s36, 0
      %p303 = por %p301, %p302
      %p304 = scmp.ne.s32.totalorder %s290, %s291
      %p305 = scmp.eq.s32.totalorder %s37, 7
      %p306 = por %p304, %p305
      %p308 = scmp.ne.s32.totalorder %s291, %s307
      %p309 = scmp.eq.s32.totalorder %s37, 0
      %p310 = por %p308, %p309
      %p311 = scmp.le.s32.totalorder 1, %s31
      %p312 = scmp.lt.s32.totalorder %s31, 9
      %p313 = pnand %p311, %p312
      %p314 = pneg %p313
      // Predicated region
      $region9: #{tpu_custom_call.1} parent=5 // pred_check
        _
      $region10: #{tpu_custom_call.1} parent=5 // pred_check_branch
        %316 = sbr.rel (%p313) target = $region12
      $region11: #{tpu_custom_call.1} parent=5 // pred_region
        %s317 = ssub.s32 %s31, 1
        // Predicated region
        $region13: #{tpu_custom_call.1} parent=11 // pred_check
          %p318 = pneg %p104
        $region14: #{tpu_custom_call.1} parent=11 // pred_check_branch
          %320 = sbr.rel (%p318) target = $region16
        $region15: #{tpu_custom_call.1} parent=11 // pred_region
          %s322 = ssub.s32 128, 128
          %323 = vsyncadd [#allocation6], %s322
          %s324 = sshll.u32 [#allocation7], 4
          %s325 = int_to_ptr.vmem [resolvable:$true] %s324
          %330 = dma.hbm_to_vmem [thread:$0]  %s2, 128, %s325, [#allocation6], 64, 64, 4
        $region16: #{tpu_custom_call.1} parent=11 // pred_fallthru
          _
        // Predicated region
        $region17: #{tpu_custom_call.1} parent=11 // pred_check
          %p331 = pneg %p125
        $region18: #{tpu_custom_call.1} parent=11 // pred_check_branch
          %333 = sbr.rel (%p331) target = $region20
        $region19: #{tpu_custom_call.1} parent=11 // pred_region
          _
        $region20: #{tpu_custom_call.1} parent=11 // pred_fallthru
          _
        // Predicated region
        $region21: #{tpu_custom_call.1} parent=11 // pred_check
          %p334 = pneg %p146
        $region22: #{tpu_custom_call.1} parent=11 // pred_check_branch
          %336 = sbr.rel (%p334) target = $region24
        $region23: #{tpu_custom_call.1} parent=11 // pred_region
          %s338 = ssub.s32 256, 256
          %339 = vsyncadd [#allocation9], %s338
          %s340 = sshll.u32 [#allocation8], 4
          %s341 = int_to_ptr.vmem [resolvable:$true] %s340
          %346 = dma.hbm_to_vmem [thread:$0]  %s4, 256, %s341, [#allocation9], 64, 64, 4
        $region24: #{tpu_custom_call.1} parent=11 // pred_fallthru
          _
        // Predicated region
        $region25: #{tpu_custom_call.1} parent=11 // pred_check
          %p347 = pneg %p167
        $region26: #{tpu_custom_call.1} parent=11 // pred_check_branch
          %349 = sbr.rel (%p347) target = $region28
        $region27: #{tpu_custom_call.1} parent=11 // pred_region
          _
        $region28: #{tpu_custom_call.1} parent=11 // pred_fallthru
          _
        // Predicated region
        $region29: #{tpu_custom_call.1} parent=11 // pred_check
          %p350 = pneg %p188
        $region30: #{tpu_custom_call.1} parent=11 // pred_check_branch
          %352 = sbr.rel (%p350) target = $region32
        $region31: #{tpu_custom_call.1} parent=11 // pred_region
          _
        $region32: #{tpu_custom_call.1} parent=11 // pred_fallthru
          _
        // Predicated region
        $region33: #{tpu_custom_call.1} parent=11 // pred_check
          %p353 = pneg %p209
        $region34: #{tpu_custom_call.1} parent=11 // pred_check_branch
          %355 = sbr.rel (%p353) target = $region36
        $region35: #{tpu_custom_call.1} parent=11 // pred_region
          _
        $region36: #{tpu_custom_call.1} parent=11 // pred_fallthru
          _
        // Predicated region
        $region37: #{tpu_custom_call.1} parent=11 // pred_check
          %p356 = pneg %p230
        $region38: #{tpu_custom_call.1} parent=11 // pred_check_branch
          %358 = sbr.rel (%p356) target = $region40
        $region39: #{tpu_custom_call.1} parent=11 // pred_region
          %s360 = ssub.s32 256, 256
          %361 = vsyncadd [#allocation9], %s360
          %s362 = sshll.u32 [#allocation10], 4
          %s363 = int_to_ptr.vmem [resolvable:$true] %s362
          %368 = dma.hbm_to_vmem [thread:$0]  %s8, 256, %s363, [#allocation9], 64, 64, 4
        $region40: #{tpu_custom_call.1} parent=11 // pred_fallthru
          _
        // Predicated region
        $region41: #{tpu_custom_call.1} parent=11 // pred_check
          %p369 = pneg %p251
        $region42: #{tpu_custom_call.1} parent=11 // pred_check_branch
          %371 = sbr.rel (%p369) target = $region44
        $region43: #{tpu_custom_call.1} parent=11 // pred_region
          _
        $region44: #{tpu_custom_call.1} parent=11 // pred_fallthru
          _
      $region12: #{tpu_custom_call.1} parent=5 // pred_fallthru
        _
      %p372 = scmp.lt.s32.totalorder %s31, 8
      // Predicated region
      $region45: #{tpu_custom_call.1} parent=5 // pred_check
        %p373 = pneg %p372
      $region46: #{tpu_custom_call.1} parent=5 // pred_check_branch
        %375 = sbr.rel (%p373) target = $region48
      $region47: #{tpu_custom_call.1} parent=5 // pred_region
        // Predicated region
        $region49: #{tpu_custom_call.1} parent=47 // pred_check
          %p376 = pneg %p51
        $region50: #{tpu_custom_call.1} parent=47 // pred_check_branch
          %378 = sbr.rel (%p376) target = $region52
        $region51: #{tpu_custom_call.1} parent=47 // pred_region
          %s379 = sand.u32 %s41, 1
          %s380 = scalar_lea.sflag [#allocation3], %s379
          %s381 = sand.u32 %s41, 1
          %s382 = smul.addr %s381, 4
          %s383 = scalar_lea.vmem [#allocation2], %s382
          %s385 = ssub.s32 64, 64
          %386 = vsyncadd %s380, %s385
          %s387 = smul.addr %s31, 64
          %s388 = scalar_lea.hbm %s0, %s387
          %s390 = sshll.u32 %s383, 4
          %s391 = int_to_ptr.vmem [resolvable:$true] %s390
          %393 = dma.hbm_to_vmem [thread:$0]  %s388, 64, %s391, %s380
        $region52: #{tpu_custom_call.1} parent=47 // pred_fallthru
          _
        // Predicated region
        $region53: #{tpu_custom_call.1} parent=47 // pred_check
          %p394 = pneg %p77
        $region54: #{tpu_custom_call.1} parent=47 // pred_check_branch
          %396 = sbr.rel (%p394) target = $region56
        $region55: #{tpu_custom_call.1} parent=47 // pred_region
          %s397 = sand.u32 %s31, 1
          %s398 = scalar_lea.sflag [#allocation6], %s397
          %s399 = sand.u32 %s67, 1
          %s400 = smul.addr %s399, 4
          %s401 = scalar_lea.vmem [#allocation5], %s400
          %s403 = ssub.s32 64, 64
          %404 = vsyncadd %s398, %s403
          %s405 = smul.addr %s31, 64
          %s406 = scalar_lea.hbm %s1, %s405
          %s408 = sshll.u32 %s401, 4
          %s409 = int_to_ptr.vmem [resolvable:$true] %s408
          %411 = dma.hbm_to_vmem [thread:$0]  %s406, 64, %s409, %s398
        $region56: #{tpu_custom_call.1} parent=47 // pred_fallthru
          _
      $region48: #{tpu_custom_call.1} parent=5 // pred_fallthru
        _
      %p412 = scmp.le.s32.totalorder 1, %s31
      %p413 = scmp.lt.s32.totalorder %s31, 9
      %p414 = pnand %p412, %p413
      %p415 = pneg %p414
      // Predicated region
      $region57: #{tpu_custom_call.1} parent=5 // pred_check
        _
      $region58: #{tpu_custom_call.1} parent=5 // pred_check_branch
        %417 = sbr.rel (%p414) target = $region60
      $region59: #{tpu_custom_call.1} parent=5 // pred_region
        %s418 = ssub.s32 %s31, 1
        %s419 = sand.u32 %s44, 1
        %s420 = scalar_lea.sflag [#allocation3], %s419
        %s421 = sand.u32 %s44, 1
        %s422 = smul.addr %s421, 4
        %s423 = scalar_lea.vmem [#allocation2], %s422
        // Predicated region
        $region61: #{tpu_custom_call.1} parent=59 // pred_check
          %p424 = pneg %p57
        $region62: #{tpu_custom_call.1} parent=59 // pred_check_branch
          %426 = sbr.rel (%p424) target = $region64
        $region63: #{tpu_custom_call.1} parent=59 // pred_region
          %427 = dma.done %s420, 64
        $region64: #{tpu_custom_call.1} parent=59 // pred_fallthru
          _
        %s428 = sand.u32 %s36, 1
        %s429 = scalar_lea.sflag [#allocation6], %s428
        %s430 = sand.u32 %s70, 1
        %s431 = smul.addr %s430, 4
        %s432 = scalar_lea.vmem [#allocation5], %s431
        // Predicated region
        $region65: #{tpu_custom_call.1} parent=59 // pred_check
          %p433 = pneg %p83
        $region66: #{tpu_custom_call.1} parent=59 // pred_check_branch
          %435 = sbr.rel (%p433) target = $region68
        $region67: #{tpu_custom_call.1} parent=59 // pred_region
          %436 = dma.done %s429, 64
        $region68: #{tpu_custom_call.1} parent=59 // pred_fallthru
          _
        // Predicated region
        $region69: #{tpu_custom_call.1} parent=59 // pred_check
          %p437 = pneg %p104
        $region70: #{tpu_custom_call.1} parent=59 // pred_check_branch
          %439 = sbr.rel (%p437) target = $region72
        $region71: #{tpu_custom_call.1} parent=59 // pred_region
          %440 = dma.done [#allocation6], 128
        $region72: #{tpu_custom_call.1} parent=59 // pred_fallthru
          _
        // Predicated region
        $region73: #{tpu_custom_call.1} parent=59 // pred_check
          %p441 = pneg %p146
        $region74: #{tpu_custom_call.1} parent=59 // pred_check_branch
          %443 = sbr.rel (%p441) target = $region76
        $region75: #{tpu_custom_call.1} parent=59 // pred_region
          %444 = dma.done [#allocation9], 256
        $region76: #{tpu_custom_call.1} parent=59 // pred_fallthru
          _
        // Predicated region
        $region77: #{tpu_custom_call.1} parent=59 // pred_check
          %p445 = pneg %p230
        $region78: #{tpu_custom_call.1} parent=59 // pred_check_branch
          %447 = sbr.rel (%p445) target = $region80
        $region79: #{tpu_custom_call.1} parent=59 // pred_region
          %448 = dma.done [#allocation9], 256
        $region80: #{tpu_custom_call.1} parent=59 // pred_fallthru
          _
        %s449 = sand.u32 %s44, 1
        %s450 = scalar_lea.sflag [#allocation3], %s449
        %s451 = sand.u32 %s44, 1
        %s452 = smul.addr %s451, 4
        %s453 = scalar_lea.vmem [#allocation2], %s452
        %p454 = pneg %p57
        %p455 = pneg %p54
        %s456 = sand.u32 %s36, 1
        %s457 = scalar_lea.sflag [#allocation6], %s456
        %s458 = sand.u32 %s70, 1
        %s459 = smul.addr %s458, 4
        %s460 = scalar_lea.vmem [#allocation5], %s459
        %p461 = pneg %p83
        %p462 = pneg %p80
        %p463 = pneg %p104
        %p464 = pneg %p101
        %p465 = pneg %p125
        %p466 = pneg %p122
        %p467 = pneg %p146
        %p468 = pneg %p143
        %p469 = pneg %p167
        %p470 = pneg %p164
        %p471 = pneg %p188
        %p472 = pneg %p185
        %p473 = pneg %p209
        %p474 = pneg %p206
        %p475 = pneg %p230
        %p476 = pneg %p227
        %p477 = pneg %p251
        %p478 = pneg %p248
        %p479 = pneg %p277
        %p480 = pneg %p274
        %s481 = sand.u32 %s264, 1
        %s482 = scalar_lea.sflag [#allocation4], %s481
        %s483 = sand.u32 %s264, 1
        %s484 = smul.addr %s483, 8
        %s485 = scalar_lea.vmem [#allocation11], %s484
        %p486 = pneg %p303
        %p487 = pneg %p300
        %s488 = sand.u32 %s290, 1
        %s489 = scalar_lea.sflag [#allocation13], %s488
        %s490 = sand.u32 %s290, 1
        %s491 = smul.addr %s490, 8
        %s492 = scalar_lea.vmem [#allocation12], %s491
        %v494 = vld [vmem:[%s423] sm:$0xf]
        %v495 = vunpack.c.l.bf16 %v494
        %v496 = vld [vmem:[%s432] sm:$0xf]
        %v497 = vld [vmem:[#allocation7] sm:$0xf]
        %v498 = vld [vmem:[#allocation7 + $0x4] sm:$0xf]
        %v501 = vunpack.c.l.b16 %v497
        %v502 = vunpack.c.l.b16 %v498
        %v503 = vpack.c.b16 %v502, %v501
        %vm505 = vcmask 130048
        %v507 = vsel %vm505, %v496, 0
        %509 = vmatprep.subr.bf16.mxu0 0
        %510 = vmatpush1.bf16.msra.mxu0 %v503
        %511 = vmatprep.subr.bf16.mxu0 0
        %512 = vmatpush1.bf16.msra.mxu0 0
        %513 = vmatprep.subr.bf16.mxu0 0
        %514 = vmatpush1.bf16.msra.mxu0 0
        %515 = vmatprep.subr.bf16.mxu0 0
        %516 = vmatpush1.bf16.msra.mxu0 0
        %517 = vmatprep.subr.bf16.mxu0 0
        %518 = vmatpush1.bf16.msra.mxu0 0
        %519 = vmatprep.subr.bf16.mxu0 0
        %520 = vmatpush1.bf16.msra.mxu0 0
        %521 = vmatprep.subr.bf16.mxu0 0
        %522 = vmatpush1.bf16.msra.mxu0 0
        %523 = vmatprep.subr.bf16.mxu0 0
        %524 = vmatpush1.bf16.msra.mxu0 0
        %525 = vmatprep.subr.bf16.mxu0 0
        %526 = vmatpush1.bf16.msra.mxu0 0
        %527 = vmatprep.subr.bf16.mxu0 0
        %528 = vmatpush1.bf16.msra.mxu0 0
        %529 = vmatprep.subr.bf16.mxu0 0
        %530 = vmatpush1.bf16.msra.mxu0 0
        %531 = vmatprep.subr.bf16.mxu0 0
        %532 = vmatpush1.bf16.msra.mxu0 0
        %533 = vmatprep.subr.bf16.mxu0 0
        %534 = vmatpush1.bf16.msra.mxu0 0
        %535 = vmatprep.subr.bf16.mxu0 0
        %536 = vmatpush1.bf16.msra.mxu0 0
        %537 = vmatprep.subr.bf16.mxu0 0
        %538 = vmatpush1.bf16.msra.mxu0 0
        %539 = vmatprep.subr.bf16.mxu0 0
        %540 = vmatpush1.bf16.msra.mxu0 0
        %541 = vmatprep.mubr.bf16.mxu0 0
        %542 = vmatmul.mubr.bf16.gmra.mrb[0].mxu0 %v507
        %v543 = vpop.f32.mrb[0].mxu0
        %v544 = vadd.f32 0.0, %v543
        %v545 = vpop.f32.mrb[0].mxu0
        %v546 = vpop.f32.mrb[0].mxu0
        %v547 = vpop.f32.mrb[0].mxu0
        %548 = vdwg.mxu0
        %v549 = vadd.f32 %v495, %v544
        %v550 = vld [vmem:[%s3] sm:$0x1]
        %v552 = vlaneseq
        %v553 = vshrl.u32 %v552, 7
        %v554 = vsub.s32 0, %v553
        %v555 = vrot.slane %v550, %v554
        %v557 = vadd.f32 %v549, %v555
        %v558 = vpack.c.bf16 %v557, %v557
        %v559 = vld [vmem:[#allocation8] sm:$0xf]
        %v560 = vld [vmem:[#allocation8 + $0x4] sm:$0xf]
        %v561 = vld [vmem:[#allocation8 + $0x8] sm:$0xf]
        %v562 = vld [vmem:[#allocation8 + $0xc] sm:$0xf]
        %v563 = vld [vmem:[%s5] sm:$0x1]
        %v565 = vlaneseq
        %v566 = vshrl.u32 %v565, 7
        %v567 = vsub.s32 0, %v566
        %v568 = vrot.slane %v563, %v567
        %v574 = vunpack.c.l.b16 %v559
        %v575 = vunpack.c.l.b16 %v560
        %v576 = vunpack.c.l.b16 %v561
        %v577 = vunpack.c.l.b16 %v562
        %v578 = vpack.c.b16 %v575, %v574
        %v579 = vpack.c.b16 %v577, %v576
        %vm582 = vcmask 261120
        %v584 = vsel %vm582, %v558, 0
        %586 = vmatprep.subr.bf16.mxu0 0
        %587 = vmatpush1.bf16.msra.mxu0 %v578
        %588 = vmatprep.subr.bf16.mxu0 0
        %589 = vmatpush1.bf16.msra.mxu0 %v579
        %590 = vmatprep.subr.bf16.mxu0 0
        %591 = vmatpush1.bf16.msra.mxu0 0
        %592 = vmatprep.subr.bf16.mxu0 0
        %593 = vmatpush1.bf16.msra.mxu0 0
        %594 = vmatprep.subr.bf16.mxu0 0
        %595 = vmatpush1.bf16.msra.mxu0 0
        %596 = vmatprep.subr.bf16.mxu0 0
        %597 = vmatpush1.bf16.msra.mxu0 0
        %598 = vmatprep.subr.bf16.mxu0 0
        %599 = vmatpush1.bf16.msra.mxu0 0
        %600 = vmatprep.subr.bf16.mxu0 0
        %601 = vmatpush1.bf16.msra.mxu0 0
        %602 = vmatprep.subr.bf16.mxu0 0
        %603 = vmatpush1.bf16.msra.mxu0 0
        %604 = vmatprep.subr.bf16.mxu0 0
        %605 = vmatpush1.bf16.msra.mxu0 0
        %606 = vmatprep.subr.bf16.mxu0 0
        %607 = vmatpush1.bf16.msra.mxu0 0
        %608 = vmatprep.subr.bf16.mxu0 0
        %609 = vmatpush1.bf16.msra.mxu0 0
        %610 = vmatprep.subr.bf16.mxu0 0
        %611 = vmatpush1.bf16.msra.mxu0 0
        %612 = vmatprep.subr.bf16.mxu0 0
        %613 = vmatpush1.bf16.msra.mxu0 0
        %614 = vmatprep.subr.bf16.mxu0 0
        %615 = vmatpush1.bf16.msra.mxu0 0
        %616 = vmatprep.subr.bf16.mxu0 0
        %617 = vmatpush1.bf16.msra.mxu0 0
        %618 = vmatprep.mubr.bf16.mxu0 0
        %619 = vmatmul.mubr.bf16.gmra.mrb[0].mxu0 %v584
        %v620 = vpop.f32.mrb[0].mxu0
        %v621 = vadd.f32 %v568, %v620
        %v622 = vpop.f32.mrb[0].mxu0
        %v623 = vpop.f32.mrb[0].mxu0
        %v624 = vpop.f32.mrb[0].mxu0
        %625 = vdwg.mxu0
        %v626 = vpack.c.bf16 %v621, %v621
        %v627 = vld [vmem:[%s6] sm:$0xf]
        %v628 = vld [vmem:[%s6 + $0x4] sm:$0xf]
        %v629 = vld [vmem:[%s6 + $0x8] sm:$0xf]
        %v630 = vld [vmem:[%s6 + $0xc] sm:$0xf]
        %v631 = vld [vmem:[%s7] sm:$0x1]
        %v633 = vlaneseq
        %v634 = vshrl.u32 %v633, 7
        %v635 = vsub.s32 0, %v634
        %v636 = vrot.slane %v631, %v635
        %v642 = vunpack.c.l.b16 %v627
        %v643 = vunpack.c.l.b16 %v628
        %v644 = vunpack.c.l.b16 %v629
        %v645 = vunpack.c.l.b16 %v630
        %v646 = vpack.c.b16 %v643, %v642
        %v647 = vpack.c.b16 %v645, %v644
        %v651 = vsel %vm582, %v626, 0
        %653 = vmatprep.subr.bf16.mxu0 0
        %654 = vmatpush1.bf16.msra.mxu0 %v646
        %655 = vmatprep.subr.bf16.mxu0 0
        %656 = vmatpush1.bf16.msra.mxu0 %v647
        %657 = vmatprep.subr.bf16.mxu0 0
        %658 = vmatpush1.bf16.msra.mxu0 0
        %659 = vmatprep.subr.bf16.mxu0 0
        %660 = vmatpush1.bf16.msra.mxu0 0
        %661 = vmatprep.subr.bf16.mxu0 0
        %662 = vmatpush1.bf16.msra.mxu0 0
        %663 = vmatprep.subr.bf16.mxu0 0
        %664 = vmatpush1.bf16.msra.mxu0 0
        %665 = vmatprep.subr.bf16.mxu0 0
        %666 = vmatpush1.bf16.msra.mxu0 0
        %667 = vmatprep.subr.bf16.mxu0 0
        %668 = vmatpush1.bf16.msra.mxu0 0
        %669 = vmatprep.subr.bf16.mxu0 0
        %670 = vmatpush1.bf16.msra.mxu0 0
        %671 = vmatprep.subr.bf16.mxu0 0
        %672 = vmatpush1.bf16.msra.mxu0 0
        %673 = vmatprep.subr.bf16.mxu0 0
        %674 = vmatpush1.bf16.msra.mxu0 0
        %675 = vmatprep.subr.bf16.mxu0 0
        %676 = vmatpush1.bf16.msra.mxu0 0
        %677 = vmatprep.subr.bf16.mxu0 0
        %678 = vmatpush1.bf16.msra.mxu0 0
        %679 = vmatprep.subr.bf16.mxu0 0
        %680 = vmatpush1.bf16.msra.mxu0 0
        %681 = vmatprep.subr.bf16.mxu0 0
        %682 = vmatpush1.bf16.msra.mxu0 0
        %683 = vmatprep.subr.bf16.mxu0 0
        %684 = vmatpush1.bf16.msra.mxu0 0
        %685 = vmatprep.mubr.bf16.mxu0 0
        %686 = vmatmul.mubr.bf16.gmra.mrb[0].mxu0 %v651
        %v687 = vpop.f32.mrb[0].mxu0
        %v688 = vadd.f32 %v636, %v687
        %v689 = vpop.f32.mrb[0].mxu0
        %v690 = vpop.f32.mrb[0].mxu0
        %v691 = vpop.f32.mrb[0].mxu0
        %692 = vdwg.mxu0
        %vm693 = vcmask 785408
        %694 = vst.msk [vmem:[%s485] sm:$0xff] %vm693, %v688
        %v695 = vld [vmem:[#allocation10] sm:$0xf]
        %v696 = vld [vmem:[#allocation10 + $0x4] sm:$0xf]
        %v697 = vld [vmem:[#allocation10 + $0x8] sm:$0xf]
        %v698 = vld [vmem:[#allocation10 + $0xc] sm:$0xf]
        %v699 = vld [vmem:[%s9] sm:$0x1]
        %v701 = vlaneseq
        %v702 = vshrl.u32 %v701, 7
        %v703 = vsub.s32 0, %v702
        %v704 = vrot.slane %v699, %v703
        %v710 = vunpack.c.l.b16 %v695
        %v711 = vunpack.c.l.b16 %v696
        %v712 = vunpack.c.l.b16 %v697
        %v713 = vunpack.c.l.b16 %v698
        %v714 = vpack.c.b16 %v711, %v710
        %v715 = vpack.c.b16 %v713, %v712
        %718 = vmatprep.subr.bf16.mxu0 0
        %719 = vmatpush1.bf16.msra.mxu0 %v714
        %720 = vmatprep.subr.bf16.mxu0 0
        %721 = vmatpush1.bf16.msra.mxu0 %v715
        %722 = vmatprep.subr.bf16.mxu0 0
        %723 = vmatpush1.bf16.msra.mxu0 0
        %724 = vmatprep.subr.bf16.mxu0 0
        %725 = vmatpush1.bf16.msra.mxu0 0
        %726 = vmatprep.subr.bf16.mxu0 0
        %727 = vmatpush1.bf16.msra.mxu0 0
        %728 = vmatprep.subr.bf16.mxu0 0
        %729 = vmatpush1.bf16.msra.mxu0 0
        %730 = vmatprep.subr.bf16.mxu0 0
        %731 = vmatpush1.bf16.msra.mxu0 0
        %732 = vmatprep.subr.bf16.mxu0 0
        %733 = vmatpush1.bf16.msra.mxu0 0
        %734 = vmatprep.subr.bf16.mxu0 0
        %735 = vmatpush1.bf16.msra.mxu0 0
        %736 = vmatprep.subr.bf16.mxu0 0
        %737 = vmatpush1.bf16.msra.mxu0 0
        %738 = vmatprep.subr.bf16.mxu0 0
        %739 = vmatpush1.bf16.msra.mxu0 0
        %740 = vmatprep.subr.bf16.mxu0 0
        %741 = vmatpush1.bf16.msra.mxu0 0
        %742 = vmatprep.subr.bf16.mxu0 0
        %743 = vmatpush1.bf16.msra.mxu0 0
        %744 = vmatprep.subr.bf16.mxu0 0
        %745 = vmatpush1.bf16.msra.mxu0 0
        %746 = vmatprep.subr.bf16.mxu0 0
        %747 = vmatpush1.bf16.msra.mxu0 0
        %748 = vmatprep.subr.bf16.mxu0 0
        %749 = vmatpush1.bf16.msra.mxu0 0
        %750 = vmatprep.mubr.bf16.mxu0 0
        %751 = vmatmul.mubr.bf16.gmra.mrb[0].mxu0 %v651
        %v752 = vpop.f32.mrb[0].mxu0
        %v753 = vadd.f32 %v704, %v752
        %v754 = vpop.f32.mrb[0].mxu0
        %v755 = vpop.f32.mrb[0].mxu0
        %v756 = vpop.f32.mrb[0].mxu0
        %757 = vdwg.mxu0
        %758 = vst.msk [vmem:[%s492] sm:$0xff] %vm693, %v753
        %s759 = sand.u32 %s264, 1
        %s760 = scalar_lea.sflag [#allocation4], %s759
        %s761 = sand.u32 %s264, 1
        %s762 = smul.addr %s761, 8
        %s763 = scalar_lea.vmem [#allocation11], %s762
        %s764 = sand.u32 %s290, 1
        %s765 = scalar_lea.sflag [#allocation13], %s764
        %s766 = sand.u32 %s290, 1
        %s767 = smul.addr %s766, 8
        %s768 = scalar_lea.vmem [#allocation12], %s767
        // Predicated region
        $region81: #{tpu_custom_call.1} parent=59 // pred_check
          %p769 = pneg %p274
        $region82: #{tpu_custom_call.1} parent=59 // pred_check_branch
          %771 = sbr.rel (%p769) target = $region84
        $region83: #{tpu_custom_call.1} parent=59 // pred_region
          %s773 = ssub.s32 128, 128
          %774 = vsyncadd %s760, %s773
          %s775 = smul.addr %s36, 128
          %s776 = scalar_lea.hbm %s10, %s775
          %s778 = sshll.u32 %s763, 4
          %s779 = int_to_ptr.vmem [resolvable:$true] %s778
          %781 = dma.vmem_to_hbm [thread:$0]  %s779, 128, %s776, %s760
        $region84: #{tpu_custom_call.1} parent=59 // pred_fallthru
          _
        // Predicated region
        $region85: #{tpu_custom_call.1} parent=59 // pred_check
          %p782 = pneg %p300
        $region86: #{tpu_custom_call.1} parent=59 // pred_check_branch
          %784 = sbr.rel (%p782) target = $region88
        $region87: #{tpu_custom_call.1} parent=59 // pred_region
          %s786 = ssub.s32 128, 128
          %787 = vsyncadd %s765, %s786
          %s788 = smul.addr %s36, 128
          %s789 = scalar_lea.hbm %s11, %s788
          %s791 = sshll.u32 %s768, 4
          %s792 = int_to_ptr.vmem [resolvable:$true] %s791
          %794 = dma.vmem_to_hbm [thread:$0]  %s792, 128, %s789, %s765
        $region88: #{tpu_custom_call.1} parent=59 // pred_fallthru
          _
      $region60: #{tpu_custom_call.1} parent=5 // pred_fallthru
        _
      %p795 = scmp.le.s32.totalorder 2, %s31
      // Predicated region
      $region89: #{tpu_custom_call.1} parent=5 // pred_check
        %p796 = pneg %p795
      $region90: #{tpu_custom_call.1} parent=5 // pred_check_branch
        %798 = sbr.rel (%p796) target = $region92
      $region91: #{tpu_custom_call.1} parent=5 // pred_region
        %s799 = ssub.s32 %s31, 2
        // Predicated region
        $region93: #{tpu_custom_call.1} parent=91 // pred_check
          %p800 = pneg %p280
        $region94: #{tpu_custom_call.1} parent=91 // pred_check_branch
          %802 = sbr.rel (%p800) target = $region96
        $region95: #{tpu_custom_call.1} parent=91 // pred_region
          %s803 = sand.u32 %s265, 1
          %s804 = scalar_lea.sflag [#allocation4], %s803
          %s805 = sand.u32 %s265, 1
          %s806 = smul.addr %s805, 8
          %s807 = scalar_lea.vmem [#allocation11], %s806
          %808 = dma.done %s804, 128
        $region96: #{tpu_custom_call.1} parent=91 // pred_fallthru
          _
        // Predicated region
        $region97: #{tpu_custom_call.1} parent=91 // pred_check
          %p809 = pneg %p306
        $region98: #{tpu_custom_call.1} parent=91 // pred_check_branch
          %811 = sbr.rel (%p809) target = $region100
        $region99: #{tpu_custom_call.1} parent=91 // pred_region
          %s812 = sand.u32 %s291, 1
          %s813 = scalar_lea.sflag [#allocation13], %s812
          %s814 = sand.u32 %s291, 1
          %s815 = smul.addr %s814, 8
          %s816 = scalar_lea.vmem [#allocation12], %s815
          %817 = dma.done %s813, 128
        $region100: #{tpu_custom_call.1} parent=91 // pred_fallthru
          _
      $region92: #{tpu_custom_call.1} parent=5 // pred_fallthru
        _
    $region6: #{tpu_custom_call.1} parent=1 // loop_footer
      %s35 = sadd.s32 1, %s31
    $region7: #{tpu_custom_call.1} parent=1 // loop_footer_branch
      %30 = sbr.rel target = $region3
    $region8: #{tpu_custom_call.1} parent=1 // loop_exit
      _
    %818 = vsyncpa [#allocation3], 1
    %s819 = scalar_lea.sflag [#allocation3], 1
    %820 = vsyncpa %s819, 1
    %821 = vsyncpa [#allocation6], 1
    %s822 = scalar_lea.sflag [#allocation6], 1
    %823 = vsyncpa %s822, 1
    %824 = vsyncpa [#allocation9], 1
    %825 = vsyncpa [#allocation4], 1
    %s826 = scalar_lea.sflag [#allocation4], 1
    %827 = vsyncpa %s826, 1
    %828 = vsyncpa [#allocation13], 1
    %s829 = scalar_lea.sflag [#allocation13], 1
    %830 = vsyncpa %s829, 1

</llo_original>
